<compile_context>
chip_gen: v5e
topology: v5e:2x2
jax: 0.10.0
libtpu: 0.0.40
codegen_flags: <defaults>
</compile_context>

<pallas_src>
import functools
import math

import jax
import jax.numpy as jnp
from jax.experimental import pallas as pl
from jax.experimental.pallas import tpu as pltpu


def _round_up(a: int, b: int) -> int:
    return (a + b - 1) // b * b


def _cdiv(a: int, b: int) -> int:
    return (a + b - 1) // b


def _vmem_capacity_bytes() -> int:
    try:
        return int(pltpu.get_tpu_info().vmem_capacity_bytes)
    except Exception:
        return 64 * 2**20  # conservative (v7x-sized) fallback


def _swishglu_epilogue(proj, gate, out_dtype):
    # SiLU(gate) = gate * sigmoid(gate); sigmoid via one exact tanh (single EUP
    # op per element, no approx-reciprocal error).
    sig = 0.5 * (jnp.tanh(0.5 * gate) + 1.0)
    return (proj * (gate * sig)).astype(out_dtype)


def _swishglu_kernel_single_k(x_ref, w_ref, b_ref, o_ref, *, tn):
    # Whole K in one tile: single fused MXU dot, no accumulator round-trip.
    # x_ref: (tm, K), w_ref: (K, 2*tn) = [W_proj tile | W_gate tile],
    # b_ref: (1, 2*tn) f32, o_ref: (tm, tn)
    y = jnp.dot(x_ref[...], w_ref[...], preferred_element_type=jnp.float32)
    proj = y[:, :tn] + b_ref[:, :tn]
    gate = y[:, tn:] + b_ref[:, tn:]
    o_ref[...] = _swishglu_epilogue(proj, gate, o_ref.dtype)


def _swishglu_kernel_kloop(x_ref, w_ref, b_ref, o_ref, acc_ref, *, tn):
    # acc_ref: (tm, 2*tn) f32, persists across the K grid axis.
    k = pl.program_id(2)

    @pl.when(k == 0)
    def _():
        acc_ref[...] = jnp.zeros_like(acc_ref)

    acc_ref[...] += jnp.dot(
        x_ref[...], w_ref[...], preferred_element_type=jnp.float32
    )

    @pl.when(k == pl.num_programs(2) - 1)
    def _():
        # Process halves from the ref (don't materialize full (tm, 2*tn) f32).
        proj = acc_ref[:, :tn] + b_ref[:, :tn]
        gate = acc_ref[:, tn:] + b_ref[:, tn:]
        o_ref[...] = _swishglu_epilogue(proj, gate, o_ref.dtype)


def prepare_swishglu_params(weight, bias, *, tn=512, tk=2048,
                            compute_dtype=jnp.bfloat16):
    """One-time conversion from PyTorch nn.Linear(in_dim, 2*out_dim) layout.

    weight: (2*out_dim, in_dim), bias: (2*out_dim,)
    Returns (w_int, b_int, out_dim, tn_e, tk_e): w_int is bf16 (compute_dtype),
    padded to (K_pad, nb * 2 * tn_e) with proj/gate column tiles interleaved
    per N-block; b_int stays f32. Call ONCE at parameter-load time.
    """
    two_out, in_dim = weight.shape
    out_dim = two_out // 2

    tn = _round_up(tn, 128)
    tk = _round_up(tk, 128)
    tn_e = min(tn, _round_up(out_dim, 128))
    full_k = _round_up(in_dim, 128)
    # Prefer a single K tile (drops the VMEM accumulator entirely) when the
    # whole padded K fits within the requested tk budget.
    tk_e = full_k if full_k <= tk else tk

    n_pad = _round_up(out_dim, tn_e)
    k_pad = _round_up(in_dim, tk_e)
    nb = n_pad // tn_e

    w = weight.T.astype(jnp.float32)  # (in_dim, 2*out_dim); x @ w == x @ W^T
    w_p = jnp.pad(w[:, :out_dim], ((0, k_pad - in_dim), (0, n_pad - out_dim)))
    w_g = jnp.pad(w[:, out_dim:], ((0, k_pad - in_dim), (0, n_pad - out_dim)))
    # Interleave per N-tile: block j = [W_proj tile j | W_gate tile j].
    w_int = jnp.stack(
        [w_p.reshape(k_pad, nb, tn_e), w_g.reshape(k_pad, nb, tn_e)], axis=2
    ).reshape(k_pad, nb * 2 * tn_e).astype(compute_dtype)

    b = bias.astype(jnp.float32)
    b_p = jnp.pad(b[:out_dim], (0, n_pad - out_dim)).reshape(nb, tn_e)
    b_g = jnp.pad(b[out_dim:], (0, n_pad - out_dim)).reshape(nb, tn_e)
    b_int = jnp.stack([b_p, b_g], axis=1).reshape(1, nb * 2 * tn_e)

    return w_int, b_int, out_dim, tn_e, tk_e


def swish_glu_pallas(x, w_int, b_int, *, out_dim, tn, tk, tm=512):
    """SwishGLU forward. x: (..., in_dim) -> (..., out_dim)."""
    out_dtype = x.dtype
    compute_dtype = w_int.dtype
    lead = x.shape[:-1]
    in_dim = x.shape[-1]
    k_pad = w_int.shape[0]
    nb = w_int.shape[1] // (2 * tn)
    n_pad = nb * tn
    kt = k_pad // tk

    m = math.prod(lead) if lead else 1

    # bf16 packs two rows per sublane -> align M blocks to 16; choose tm_e to
    # minimize pad waste for ragged M instead of always padding up to tm.
    m_align = 16 if jnp.dtype(compute_dtype).itemsize < 4 else 8
    tm = max(_round_up(tm, m_align), m_align)
    nmb = max(1, _cdiv(m, tm))
    tm_e = min(tm, _round_up(_cdiv(m, nmb), m_align))
    m_pad = _round_up(m, tm_e)

    x2 = x.reshape(m, in_dim).astype(compute_dtype)
    if m_pad != m or k_pad != in_dim:
        x2 = jnp.pad(x2, ((0, m_pad - m), (0, k_pad - in_dim)))

    cbytes = jnp.dtype(compute_dtype).itemsize
    obytes = jnp.dtype(out_dtype).itemsize

    vmem_est = (
        2 * tm_e * tk * cbytes                      # x tiles (double-buffered)
        + 2 * tk * 2 * tn * cbytes                  # fused weight tiles
        + 2 * 2 * tn * 4                            # bias tiles (f32)
        + 2 * tm_e * tn * obytes                    # output tiles
        + (tm_e * 2 * tn * 4 if kt > 1 else 0)      # f32 accumulator scratch
    )
    # Per-generation scoped-VMEM cap: ~96 MiB on v5e/v6e (128 MiB physical),
    # ~48 MiB on v7x (64 MiB physical).
    vmem_limit = int(
        min(max(2 * vmem_est, 32 * 2**20), (3 * _vmem_capacity_bytes()) // 4)
    )

    cost = pl.CostEstimate(
        flops=2 * m_pad * k_pad * (2 * n_pad),
        transcendentals=m_pad * n_pad,  # one tanh per output element
        bytes_accessed=(
            m_pad * k_pad * cbytes
            + w_int.size * cbytes
            + b_int.size * 4
            + m_pad * n_pad * obytes
        ),
    )

    if kt == 1:
        # Single-K fast path: 2-D grid, no accumulator, no pl.when.
        grid_spec = pltpu.PrefetchScalarGridSpec(
            num_scalar_prefetch=0,
            grid=(m_pad // tm_e, nb),
            in_specs=[
                pl.BlockSpec((tm_e, tk), lambda i, j: (i, 0)),      # x
                pl.BlockSpec((tk, 2 * tn), lambda i, j: (0, j)),    # fused W
                pl.BlockSpec((1, 2 * tn), lambda i, j: (0, j)),     # fused b
            ],
            out_specs=pl.BlockSpec((tm_e, tn), lambda i, j: (i, j)),
        )
        kernel = functools.partial(_swishglu_kernel_single_k, tn=tn)
        dims = ("parallel", "parallel")
    else:
        grid_spec = pltpu.PrefetchScalarGridSpec(
            num_scalar_prefetch=0,
            grid=(m_pad // tm_e, nb, kt),
            in_specs=[
                pl.BlockSpec((tm_e, tk), lambda i, j, k: (i, k)),    # x
                pl.BlockSpec((tk, 2 * tn), lambda i, j, k: (k, j)),  # fused W
                pl.BlockSpec((1, 2 * tn), lambda i, j, k: (0, j)),   # fused b
            ],
            out_specs=pl.BlockSpec((tm_e, tn), lambda i, j, k: (i, j)),
            scratch_shapes=[pltpu.VMEM((tm_e, 2 * tn), jnp.float32)],
        )
        kernel = functools.partial(_swishglu_kernel_kloop, tn=tn)
        dims = ("parallel", "parallel", "arbitrary")

    out = pl.pallas_call(
        kernel,
        out_shape=jax.ShapeDtypeStruct((m_pad, n_pad), out_dtype),
        grid_spec=grid_spec,
        compiler_params=pltpu.CompilerParams(
            dimension_semantics=dims,
            vmem_limit_bytes=vmem_limit,
        ),
        cost_estimate=cost,
    )(x2, w_int, b_int)

    if m_pad != m or n_pad != out_dim:
        out = out[:m, :out_dim]
    return out.reshape(*lead, out_dim)


def _ref_swishglu(x, weight, bias, out_dim, cast_dtype=None):
    """Pure-JAX reference (PyTorch semantics); optional operand quantization."""
    if cast_dtype is not None:
        xx = x.astype(cast_dtype).astype(jnp.float32)
        ww = weight.astype(cast_dtype).astype(jnp.float32)
    else:
        xx = x.astype(jnp.float32)
        ww = weight.astype(jnp.float32)
    full = xx @ ww.T + bias.astype(jnp.float32)
    proj, gate = full[..., :out_dim], full[..., out_dim:]
    return proj * (gate * jax.nn.sigmoid(gate))


if __name__ == "__main__":
    key = jax.random.PRNGKey(0)
    fwd = jax.jit(
        swish_glu_pallas, static_argnames=("out_dim", "tn", "tk", "tm")
    )

    # ---- Test 1: small shapes (single-K fast path) -------------------------
    batch, seq, in_dim, out_dim = 2, 8, 32, 16
    k1, k2, k3, key = jax.random.split(key, 4)
    x = jax.random.normal(k1, (batch, seq, in_dim), dtype=jnp.float32)
    bound = 1.0 / (in_dim ** 0.5)
    weight = jax.random.uniform(k2, (2 * out_dim, in_dim), jnp.float32, -bound, bound)
    bias = jax.random.uniform(k3, (2 * out_dim,), jnp.float32, -bound, bound)

    w_int, b_int, odim, tn_e, tk_e = prepare_swishglu_params(weight, bias)
    out = fwd(x, w_int, b_int, out_dim=odim, tn=tn_e, tk=tk_e, tm=512)
    out = jax.block_until_ready(out)
    assert out.shape == (batch, seq, out_dim)

    ref_q = _ref_swishglu(x, weight, bias, out_dim, cast_dtype=jnp.bfloat16)
    ref_f = _ref_swishglu(x, weight, bias, out_dim)
    # Tight check vs bf16-operand reference (kernel-exact up to accum order).
    assert jnp.allclose(out, ref_q, atol=2e-3, rtol=2e-3), (
        float(jnp.max(jnp.abs(out - ref_q)))
    )
    # Looser check vs full-f32 PyTorch-semantics reference (covers bf16 quant).
    assert jnp.allclose(out, ref_f, atol=4e-2, rtol=4e-2), (
        float(jnp.max(jnp.abs(out - ref_f)))
    )

    # ---- Test 2: force the K-loop (accumulator) path -----------------------
    in_dim2, out_dim2 = 384, 32
    k1, k2, k3, key = jax.random.split(key, 4)
    x2 = jax.random.normal(k1, (batch, seq, in_dim2), dtype=jnp.float32)
    bound2 = 1.0 / (in_dim2 ** 0.5)
    weight2 = jax.random.uniform(k2, (2 * out_dim2, in_dim2), jnp.float32, -bound2, bound2)
    bias2 = jax.random.uniform(k3, (2 * out_dim2,), jnp.float32, -bound2, bound2)

    w_int2, b_int2, odim2, tn2, tk2 = prepare_swishglu_params(
        weight2, bias2, tn=128, tk=128
    )
    out2 = fwd(x2, w_int2, b_int2, out_dim=odim2, tn=tn2, tk=tk2, tm=512)
    out2 = jax.block_until_ready(out2)
    assert out2.shape == (batch, seq, out_dim2)

    ref2_q = _ref_swishglu(x2, weight2, bias2, out_dim2, cast_dtype=jnp.bfloat16)
    ref2_f = _ref_swishglu(x2, weight2, bias2, out_dim2)
    assert jnp.allclose(out2, ref2_q, atol=2e-3, rtol=2e-3), (
        float(jnp.max(jnp.abs(out2 - ref2_q)))
    )
    assert jnp.allclose(out2, ref2_f, atol=4e-2, rtol=4e-2), (
        float(jnp.max(jnp.abs(out2 - ref2_f)))
    )

    print("KERNEL_OK")
</pallas_src>

<mosaic_0001>
module attributes {stable_mosaic.version = 11 : i64} {
  func.func @_swishglu_kernel_single_k(%arg0: i32, %arg1: i32, %arg2: memref<16x128xbf16, #tpu.memory_space<vmem>>, %arg3: memref<128x256xbf16, #tpu.memory_space<vmem>>, %arg4: memref<1x256xf32, #tpu.memory_space<vmem>>, %arg5: memref<16x128xf32, #tpu.memory_space<vmem>>) attributes {dimension_semantics = [#tpu.dimension_semantics<parallel>, #tpu.dimension_semantics<parallel>], iteration_bounds = array<i64: 1, 1>, scalar_prefetch = 0 : i64, scratch_operands = 0 : i64, tpu.core_type = #tpu.core_type<tc>, window_params = [{transform_indices = @transform_0, window_bounds = array<i64: 16, 128>}, {transform_indices = @transform_1, window_bounds = array<i64: 128, 256>}, {transform_indices = @transform_2, window_bounds = array<i64: 1, 256>}, {transform_indices = @transform_3, window_bounds = array<i64: 16, 128>}]} {
    %c0 = arith.constant 0 : index
    %c0_0 = arith.constant 0 : index
    %0 = vector.load %arg2[%c0, %c0_0] : memref<16x128xbf16, #tpu.memory_space<vmem>>, vector<16x128xbf16>
    %c0_1 = arith.constant 0 : index
    %c0_2 = arith.constant 0 : index
    %1 = vector.load %arg3[%c0_1, %c0_2] : memref<128x256xbf16, #tpu.memory_space<vmem>>, vector<128x256xbf16>
    %cst = arith.constant dense<0.000000e+00> : vector<16x256xf32>
    %2 = tpu.matmul %0, %1, %cst {dimension_numbers = #tpu.dot_dimension_numbers<[1], [0], [0], [1], [0, 0, 1, 1], [], []>} : vector<16x128xbf16>, vector<128x256xbf16>, vector<16x256xf32> -> vector<16x256xf32>
    %3 = vector.extract_strided_slice %2 {offsets = [0, 0], sizes = [16, 128], strides = [1, 1]} : vector<16x256xf32> to vector<16x128xf32>
    %c0_3 = arith.constant 0 : index
    %c0_4 = arith.constant 0 : index
    %4 = vector.load %arg4[%c0_3, %c0_4] : memref<1x256xf32, #tpu.memory_space<vmem>>, vector<1x128xf32>
    %5 = vector.broadcast %4 : vector<1x128xf32> to vector<16x128xf32>
    %6 = arith.addf %3, %5 : vector<16x128xf32>
    %7 = vector.extract_strided_slice %2 {offsets = [0, 128], sizes = [16, 128], strides = [1, 1]} : vector<16x256xf32> to vector<16x128xf32>
    %c0_5 = arith.constant 0 : index
    %c128 = arith.constant 128 : index
    %8 = vector.load %arg4[%c0_5, %c128] : memref<1x256xf32, #tpu.memory_space<vmem>>, vector<1x128xf32>
    %9 = vector.broadcast %8 : vector<1x128xf32> to vector<16x128xf32>
    %10 = arith.addf %7, %9 : vector<16x128xf32>
    %cst_6 = arith.constant 5.000000e-01 : f32
    %11 = vector.broadcast %cst_6 : f32 to vector<16x128xf32>
    %12 = arith.mulf %11, %10 : vector<16x128xf32>
    %13 = math.tanh %12 : vector<16x128xf32>
    %cst_7 = arith.constant 1.000000e+00 : f32
    %14 = vector.broadcast %cst_7 : f32 to vector<16x128xf32>
    %15 = arith.addf %13, %14 : vector<16x128xf32>
    %cst_8 = arith.constant 5.000000e-01 : f32
    %16 = vector.broadcast %cst_8 : f32 to vector<16x128xf32>
    %17 = arith.mulf %16, %15 : vector<16x128xf32>
    %18 = arith.mulf %10, %17 : vector<16x128xf32>
    %19 = arith.mulf %6, %18 : vector<16x128xf32>
    %c0_9 = arith.constant 0 : index
    %c0_10 = arith.constant 0 : index
    %20 = vector.load %arg5[%c0_9, %c0_10] : memref<16x128xf32, #tpu.memory_space<vmem>>, vector<16x128xf32>
    tpu.vector_store %arg5[%c0_9, %c0_10], %19 {strides = array<i32>} : memref<16x128xf32, #tpu.memory_space<vmem>>, vector<16x128xf32>,
    return
  }
  func.func @transform_0(%arg0: i32, %arg1: i32) -> (i32, i32) {
    %c0_i32 = arith.constant 0 : i32
    %c0_i32_0 = arith.constant 0 : i32
    return %arg0, %c0_i32 : i32, i32
  }
  func.func @transform_1(%arg0: i32, %arg1: i32) -> (i32, i32) {
    %c0_i32 = arith.constant 0 : i32
    %c0_i32_0 = arith.constant 0 : i32
    return %c0_i32, %arg1 : i32, i32
  }
  func.func @transform_2(%arg0: i32, %arg1: i32) -> (i32, i32) {
    %c0_i32 = arith.constant 0 : i32
    %c0_i32_0 = arith.constant 0 : i32
    return %c0_i32, %arg1 : i32, i32
  }
  func.func @transform_3(%arg0: i32, %arg1: i32) -> (i32, i32) {
    %c0_i32 = arith.constant 0 : i32
    return %arg0, %arg1 : i32, i32
  }
}

</mosaic_0001>

<llo_original>
// kernel: swish_glu_pallas.1
$region0: #{swish_glu_pallas.1}
  #allocation0 [shape = 'u32[]', space=smem, size = 0x4, offset = 0x4, fixed_abs, tag = 'smem constant byte address 0x4 - core index']
  #allocation1 [shape = 'u32[72,128]{1,0:T(1,128)}', space=vmem, size = 0x9000, scoped, tag = 'internal scratch']
  %s0 = inlined_call_operand.vmem [shape: bf16[16,128], index: 0, kind: input, shape index: {}]
  %s1 = inlined_call_operand.hbm [shape: bf16[128,256], index: 1, kind: input, shape index: {}]
  %s2 = inlined_call_operand.vmem [shape: f32[1,256], index: 2, kind: input, shape index: {}]
  %s3 = inlined_call_operand.vmem [shape: f32[16,128], index: 3, kind: output, shape index: {}]
  %s4 = sld [smem:[#allocation0]]
  $region26: #{swish_glu_pallas.1} parent=0
    _
  %s6 = ssub.s32 1, %s4
  %s7 = scalar_select 0, %s6, %s4
  $region1: #{swish_glu_pallas.1} parent=0
    #allocation2 [shape = 'u8[65536]{0}', space=vmem, size = 0x10000, scoped, tag = 'input window, operand 1, single buffered']
    #allocation3 [shape = 's32[1]{0}', space=sflag, size = 0x4, scoped, tag = 'scoped memory for swish_glu_pallas.1']
    %8 = vsyncpa [#allocation3], 0
    // Predicated region
    $region2: #{swish_glu_pallas.1} parent=1 // pred_check
      _
    $region3: #{swish_glu_pallas.1} parent=1 // pred_check_branch
      %10 = sbr.rel (0) target = $region5
    $region4: #{swish_glu_pallas.1} parent=1 // pred_region
      _
    $region5: #{swish_glu_pallas.1} parent=1 // pred_fallthru
      _
    // Predicated region
    $region6: #{swish_glu_pallas.1} parent=1 // pred_check
      _
    $region7: #{swish_glu_pallas.1} parent=1 // pred_check_branch
      %12 = sbr.rel (0) target = $region9
    $region8: #{swish_glu_pallas.1} parent=1 // pred_region
      %14 = vsyncadd [#allocation3], 0
      %s15 = sshll.u32 %s1, 4
      %s16 = int_to_ptr.hbm [resolvable:$true] %s15
      %s17 = sshll.u32 [#allocation2], 4
      %s18 = int_to_ptr.vmem [resolvable:$true] %s17
      %23 = dma.hbm_to_vmem [thread:$0]  %s16, 2048, %s18, [#allocation3], 128, 128, 8
    $region9: #{swish_glu_pallas.1} parent=1 // pred_fallthru
      _
    // Predicated region
    $region10: #{swish_glu_pallas.1} parent=1 // pred_check
      _
    $region11: #{swish_glu_pallas.1} parent=1 // pred_check_branch
      %25 = sbr.rel (0) target = $region13
    $region12: #{swish_glu_pallas.1} parent=1 // pred_region
      _
    $region13: #{swish_glu_pallas.1} parent=1 // pred_fallthru
      _
    // Predicated region
    $region14: #{swish_glu_pallas.1} parent=1 // pred_check
      _
    $region15: #{swish_glu_pallas.1} parent=1 // pred_check_branch
      %27 = sbr.rel (0) target = $region17
    $region16: #{swish_glu_pallas.1} parent=1 // pred_region
      %29 = dma.done [#allocation3], 2048
    $region17: #{swish_glu_pallas.1} parent=1 // pred_fallthru
      _
    %v30 = vld [vmem:[%s0] sm:$0xf]
    %v31 = vld [vmem:[%s0 + $0x4] sm:$0xf]
    %v32 = vld [vmem:[#allocation2] sm:$0xff]
    %v33 = vld [vmem:[#allocation2 + $0x8] sm:$0xff]
    %v34 = vld [vmem:[#allocation2 + $0x10] sm:$0xff]
    %v35 = vld [vmem:[#allocation2 + $0x18] sm:$0xff]
    %v36 = vld [vmem:[#allocation2 + $0x20] sm:$0xff]
    %v37 = vld [vmem:[#allocation2 + $0x28] sm:$0xff]
    %v38 = vld [vmem:[#allocation2 + $0x30] sm:$0xff]
    %v39 = vld [vmem:[#allocation2 + $0x38] sm:$0xff]
    %v40 = vld [vmem:[#allocation2 + $0x40] sm:$0xff]
    %v41 = vld [vmem:[#allocation2 + $0x48] sm:$0xff]
    %v42 = vld [vmem:[#allocation2 + $0x50] sm:$0xff]
    %v43 = vld [vmem:[#allocation2 + $0x58] sm:$0xff]
    %v44 = vld [vmem:[#allocation2 + $0x60] sm:$0xff]
    %v45 = vld [vmem:[#allocation2 + $0x68] sm:$0xff]
    %v46 = vld [vmem:[#allocation2 + $0x70] sm:$0xff]
    %v47 = vld [vmem:[#allocation2 + $0x78] sm:$0xff]
    %v50 = vunpack.c.l.b16 %v30
    %v51 = vunpack.c.l.b16 %v31
    %v52 = vpack.c.b16 %v51, %v50
    %v70 = vunpack.c.l.b16 %v32
    %v71 = vunpack.c.h.b16 %v32
    %v72 = vunpack.c.l.b16 %v33
    %v73 = vunpack.c.h.b16 %v33
    %v74 = vunpack.c.l.b16 %v34
    %v75 = vunpack.c.h.b16 %v34
    %v76 = vunpack.c.l.b16 %v35
    %v77 = vunpack.c.h.b16 %v35
    %v78 = vunpack.c.l.b16 %v36
    %v79 = vunpack.c.h.b16 %v36
    %v80 = vunpack.c.l.b16 %v37
    %v81 = vunpack.c.h.b16 %v37
    %v82 = vunpack.c.l.b16 %v38
    %v83 = vunpack.c.h.b16 %v38
    %v84 = vunpack.c.l.b16 %v39
    %v85 = vunpack.c.h.b16 %v39
    %v86 = vunpack.c.l.b16 %v40
    %v87 = vunpack.c.h.b16 %v40
    %v88 = vunpack.c.l.b16 %v41
    %v89 = vunpack.c.h.b16 %v41
    %v90 = vunpack.c.l.b16 %v42
    %v91 = vunpack.c.h.b16 %v42
    %v92 = vunpack.c.l.b16 %v43
    %v93 = vunpack.c.h.b16 %v43
    %v94 = vunpack.c.l.b16 %v44
    %v95 = vunpack.c.h.b16 %v44
    %v96 = vunpack.c.l.b16 %v45
    %v97 = vunpack.c.h.b16 %v45
    %v98 = vunpack.c.l.b16 %v46
    %v99 = vunpack.c.h.b16 %v46
    %v100 = vunpack.c.l.b16 %v47
    %v101 = vunpack.c.h.b16 %v47
    %v102 = vpack.c.b16 %v72, %v70
    %v103 = vpack.c.b16 %v73, %v71
    %v104 = vpack.c.b16 %v76, %v74
    %v105 = vpack.c.b16 %v77, %v75
    %v106 = vpack.c.b16 %v80, %v78
    %v107 = vpack.c.b16 %v81, %v79
    %v108 = vpack.c.b16 %v84, %v82
    %v109 = vpack.c.b16 %v85, %v83
    %v110 = vpack.c.b16 %v88, %v86
    %v111 = vpack.c.b16 %v89, %v87
    %v112 = vpack.c.b16 %v92, %v90
    %v113 = vpack.c.b16 %v93, %v91
    %v114 = vpack.c.b16 %v96, %v94
    %v115 = vpack.c.b16 %v97, %v95
    %v116 = vpack.c.b16 %v100, %v98
    %v117 = vpack.c.b16 %v101, %v99
    %134 = vmatpush.bf16.msra.mxu0 %v116
    %135 = vmatpush.bf16.msra.mxu0 %v114
    %136 = vmatpush.bf16.msra.mxu0 %v112
    %137 = vmatpush.bf16.msra.mxu0 %v110
    %138 = vmatpush.bf16.msra.mxu0 %v108
    %139 = vmatpush.bf16.msra.mxu0 %v106
    %140 = vmatpush.bf16.msra.mxu0 %v104
    %141 = vmatpush.bf16.msra.mxu0 %v102
    %142 = vmatmul.bf16.gmra.mxu0 %v52
    %v143 = vpop.f32.mrf.mxu0
    %v144 = vadd.f32 0.0, %v143
    %v145 = vpop.f32.mrf.mxu0
    %v146 = vadd.f32 0.0, %v145
    %147 = vdwg.mxu0
    %148 = vmatpush.bf16.msra.mxu0 %v117
    %149 = vmatpush.bf16.msra.mxu0 %v115
    %150 = vmatpush.bf16.msra.mxu0 %v113
    %151 = vmatpush.bf16.msra.mxu0 %v111
    %152 = vmatpush.bf16.msra.mxu0 %v109
    %153 = vmatpush.bf16.msra.mxu0 %v107
    %154 = vmatpush.bf16.msra.mxu0 %v105
    %155 = vmatpush.bf16.msra.mxu0 %v103
    %156 = vmatmul.bf16.gmra.mxu0 %v52
    %v157 = vpop.f32.mrf.mxu0
    %v158 = vadd.f32 0.0, %v157
    %v159 = vpop.f32.mrf.mxu0
    %v160 = vadd.f32 0.0, %v159
    %161 = vdwg.mxu0
    %v162 = vld [vmem:[%s2] sm:$0x1]
    %v164 = vperm.slane %v162, 0
    %v166 = vadd.f32 %v144, %v164
    %v167 = vadd.f32 %v146, %v164
    %v168 = vld [vmem:[%s2 + $0x1] sm:$0x1]
    %v170 = vperm.slane %v168, 0
    %v172 = vadd.f32 %v158, %v170
    %v173 = vadd.f32 %v160, %v170
    %v174 = vmul.f32 %v172, 0.5
    %v175 = vmul.f32 %v173, 0.5
    %v176 = vtanh.pop %v174
    %v177 = vtanh.pop %v175
    %v178 = vadd.f32 %v176, 1.0
    %v179 = vadd.f32 %v177, 1.0
    %v180 = vmul.f32 %v178, 0.5
    %v181 = vmul.f32 %v179, 0.5
    %v182 = vmul.f32 %v172, %v180
    %v183 = vmul.f32 %v173, %v181
    %v184 = vmul.f32 %v166, %v182
    %v185 = vmul.f32 %v167, %v183
    %186 = vst [vmem:[%s3] sm:$0xff] %v184
    %187 = vst [vmem:[%s3 + $0x8] sm:$0xff] %v185
    // Predicated region
    $region18: #{swish_glu_pallas.1} parent=1 // pred_check
      _
    $region19: #{swish_glu_pallas.1} parent=1 // pred_check_branch
      %189 = sbr.rel (0) target = $region21
    $region20: #{swish_glu_pallas.1} parent=1 // pred_region
      _
    $region21: #{swish_glu_pallas.1} parent=1 // pred_fallthru
      _
    // Predicated region
    $region22: #{swish_glu_pallas.1} parent=1 // pred_check
      _
    $region23: #{swish_glu_pallas.1} parent=1 // pred_check_branch
      %191 = sbr.rel (0) target = $region25
    $region24: #{swish_glu_pallas.1} parent=1 // pred_region
      _
    $region25: #{swish_glu_pallas.1} parent=1 // pred_fallthru
      _
    %192 = vsyncpa [#allocation3], 1

</llo_original>
